<compile_context>
chip_gen: v7x
topology: tpu7x:2x2x1
jax: 0.10.0
libtpu: 0.0.40
codegen_flags: <defaults>
</compile_context>

<pallas_src>
import functools

import jax
import jax.numpy as jnp
from jax.experimental import pallas as pl
from jax.experimental.pallas import tpu as pltpu


def _round_up(x: int, m: int) -> int:
    return (x + m - 1) // m * m


def _linear_ln_relu_kernel(x_ref, wt_ref, b_ref, g_ref, beta_ref, o_ref,
                           *, out_feat, eps):
    """Fused Linear + LayerNorm + ReLU for one tile of rows.

    x_ref:    (tm, Kp)   input rows (compute dtype, e.g. bf16)
    wt_ref:   (Kp, Np)   transposed weight (compute dtype)
    b_ref:    (1,  Np)   bias   (f32)
    g_ref:    (1,  Np)   LN gamma (f32)
    beta_ref: (1,  Np)   LN beta  (f32)
    o_ref:    (tm, Np)   output (f32)
    """
    # MXU matmul with f32 accumulation.
    y = jnp.dot(x_ref[...], wt_ref[...], preferred_element_type=jnp.float32)
    y = y + b_ref[...]

    # Mask padded out_feat lanes so LayerNorm statistics are exact.
    lane = jax.lax.broadcasted_iota(jnp.int32, y.shape, dimension=1)
    valid = lane < out_feat
    y = jnp.where(valid, y, 0.0)

    inv_f = 1.0 / out_feat
    mean = jnp.sum(y, axis=-1, keepdims=True) * inv_f
    centered = jnp.where(valid, y - mean, 0.0)
    var = jnp.sum(centered * centered, axis=-1, keepdims=True) * inv_f
    inv_std = jax.lax.rsqrt(var + eps)

    out = centered * inv_std * g_ref[...] + beta_ref[...]
    o_ref[...] = jnp.maximum(out, 0.0).astype(o_ref.dtype)


@functools.partial(jax.jit, static_argnames=("eps", "compute_dtype"))
def linear_block_forward(x, weight, bias, gamma, beta, *, eps=1e-5,
                         compute_dtype=jnp.bfloat16):
    """Equivalent of relu(LayerNorm(Linear(x))).

    x:      (..., in_feat)        float32
    weight: (out_feat, in_feat)   float32
    bias:   (out_feat,)           float32
    gamma:  (out_feat,)           float32   (LayerNorm weight)
    beta:   (out_feat,)           float32   (LayerNorm bias)
    returns (..., out_feat)       float32
    """
    *lead, in_feat = x.shape
    out_feat, in_feat_w = weight.shape
    assert in_feat == in_feat_w

    M = 1
    for d in lead:
        M *= d
    x2 = x.reshape(M, in_feat)

    # --- padded / tiled dims -------------------------------------------------
    # K only needs sublane granularity (16 covers bf16 and f32); the lane axis
    # of x is a full-extent block so no 128-padding of the contraction.
    Kp = _round_up(in_feat, 16)
    Np = _round_up(out_feat, 128)          # lane-dense output
    tm = min(512, _round_up(M, 16))        # row tile (sublane axis)
    Mp = _round_up(M, tm)

    itemsize = jnp.dtype(compute_dtype).itemsize

    x_p = jnp.pad(x2, ((0, Mp - M), (0, Kp - in_feat))).astype(compute_dtype)
    wt_p = jnp.pad(weight.T, ((0, Kp - in_feat), (0, Np - out_feat))
                   ).astype(compute_dtype)
    b_p = jnp.pad(bias, (0, Np - out_feat)).reshape(1, Np).astype(jnp.float32)
    g_p = jnp.pad(gamma, (0, Np - out_feat)).reshape(1, Np).astype(jnp.float32)
    beta_p = jnp.pad(beta, (0, Np - out_feat)).reshape(1, Np).astype(jnp.float32)

    kernel = functools.partial(_linear_ln_relu_kernel,
                               out_feat=out_feat, eps=eps)

    cost = pl.CostEstimate(
        flops=2 * Mp * Kp * Np + 10 * Mp * Np,
        transcendentals=Mp,
        bytes_accessed=(Mp * Kp * itemsize      # x tiles
                        + Kp * Np * itemsize    # weight
                        + 3 * Np * 4            # bias / gamma / beta
                        + Mp * Np * 4))         # output

    out_p = pl.pallas_call(
        kernel,
        out_shape=jax.ShapeDtypeStruct((Mp, Np), jnp.float32),
        grid_spec=pltpu.PrefetchScalarGridSpec(
            num_scalar_prefetch=0,
            grid=(Mp // tm,),
            in_specs=[
                pl.BlockSpec((tm, Kp), lambda i: (i, 0)),   # x rows
                pl.BlockSpec((Kp, Np), lambda i: (0, 0)),   # W^T (resident)
                pl.BlockSpec((1, Np), lambda i: (0, 0)),    # bias
                pl.BlockSpec((1, Np), lambda i: (0, 0)),    # gamma
                pl.BlockSpec((1, Np), lambda i: (0, 0)),    # beta
            ],
            out_specs=pl.BlockSpec((tm, Np), lambda i: (i, 0)),
        ),
        compiler_params=pltpu.CompilerParams(
            dimension_semantics=("parallel",)),   # shard rows across TCs (v7x)
        cost_estimate=cost,
    )(x_p, wt_p, b_p, g_p, beta_p)

    # Un-pad; (..., out_feat) is already the natural layout (no transpose).
    return out_p[:M, :out_feat].reshape(*lead, out_feat)


def _reference(x, weight, bias, gamma, beta, eps=1e-5):
    lin = x @ weight.T + bias
    mean = lin.mean(-1, keepdims=True)
    var = ((lin - mean) ** 2).mean(-1, keepdims=True)
    normed = (lin - mean) * jax.lax.rsqrt(var + eps)
    return jnp.maximum(normed * gamma + beta, 0.0)


if __name__ == "__main__":
    # Module config: linear_block(in_feat=32, out_feat=64); batch=2, seq=8.
    in_feat, out_feat = 32, 64
    N, S = 2, 8

    key = jax.random.PRNGKey(0)
    kx, kw, kb = jax.random.split(key, 3)
    x = jax.random.normal(kx, (N, S, in_feat), dtype=jnp.float32)
    # Deterministic params (shapes match nn.Linear(32, 64) + nn.LayerNorm(64)).
    bound = 1.0 / (in_feat ** 0.5)
    weight = jax.random.uniform(kw, (out_feat, in_feat), jnp.float32,
                                -bound, bound)
    bias = jax.random.uniform(kb, (out_feat,), jnp.float32, -bound, bound)
    gamma = jnp.ones((out_feat,), jnp.float32)   # nn.LayerNorm default init
    beta = jnp.zeros((out_feat,), jnp.float32)

    ref = _reference(x, weight, bias, gamma, beta)

    # Default (bf16 matmul inputs, f32 accumulation) -> relaxed tolerance.
    y = linear_block_forward(x, weight, bias, gamma, beta)
    jax.block_until_ready(y)
    assert y.shape == ref.shape, (y.shape, ref.shape)
    assert jnp.allclose(y, ref, atol=3e-2, rtol=3e-2), \
        float(jnp.abs(y - ref).max())

    # f32 compute path -> exact-ish check.
    y32 = linear_block_forward(x, weight, bias, gamma, beta,
                               compute_dtype=jnp.float32)
    jax.block_until_ready(y32)
    assert jnp.allclose(y32, ref, atol=1e-5, rtol=1e-5), \
        float(jnp.abs(y32 - ref).max())

    print("KERNEL_OK")
</pallas_src>

<mosaic_0001>
module attributes {stable_mosaic.version = 11 : i64} {
  func.func @_linear_ln_relu_kernel(%arg0: i32, %arg1: memref<16x32xbf16, #tpu.memory_space<vmem>>, %arg2: memref<32x128xbf16, #tpu.memory_space<vmem>>, %arg3: memref<1x128xf32, #tpu.memory_space<vmem>>, %arg4: memref<1x128xf32, #tpu.memory_space<vmem>>, %arg5: memref<1x128xf32, #tpu.memory_space<vmem>>, %arg6: memref<16x128xf32, #tpu.memory_space<vmem>>) attributes {dimension_semantics = [#tpu.dimension_semantics<parallel>], iteration_bounds = array<i64: 1>, scalar_prefetch = 0 : i64, scratch_operands = 0 : i64, tpu.core_type = #tpu.core_type<tc>, window_params = [{transform_indices = @transform_0, window_bounds = array<i64: 16, 32>}, {pipeline_mode = #tpu.pipeline_mode<synchronous>, transform_indices = @transform_1, window_bounds = array<i64: 32, 128>}, {pipeline_mode = #tpu.pipeline_mode<synchronous>, transform_indices = @transform_2, window_bounds = array<i64: 1, 128>}, {pipeline_mode = #tpu.pipeline_mode<synchronous>, transform_indices = @transform_3, window_bounds = array<i64: 1, 128>}, {pipeline_mode = #tpu.pipeline_mode<synchronous>, transform_indices = @transform_4, window_bounds = array<i64: 1, 128>}, {transform_indices = @transform_5, window_bounds = array<i64: 16, 128>}]} {
    %c0 = arith.constant 0 : index
    %c0_0 = arith.constant 0 : index
    %0 = vector.load %arg1[%c0, %c0_0] : memref<16x32xbf16, #tpu.memory_space<vmem>>, vector<16x32xbf16>
    %c0_1 = arith.constant 0 : index
    %c0_2 = arith.constant 0 : index
    %1 = vector.load %arg2[%c0_1, %c0_2] : memref<32x128xbf16, #tpu.memory_space<vmem>>, vector<32x128xbf16>
    %cst = arith.constant dense<0.000000e+00> : vector<16x128xf32>
    %2 = tpu.matmul %0, %1, %cst {dimension_numbers = #tpu.dot_dimension_numbers<[1], [0], [0], [1], [0, 0, 1, 1], [], []>} : vector<16x32xbf16>, vector<32x128xbf16>, vector<16x128xf32> -> vector<16x128xf32>
    %c0_3 = arith.constant 0 : index
    %c0_4 = arith.constant 0 : index
    %3 = vector.load %arg3[%c0_3, %c0_4] : memref<1x128xf32, #tpu.memory_space<vmem>>, vector<1x128xf32>
    %4 = vector.broadcast %3 : vector<1x128xf32> to vector<16x128xf32>
    %5 = arith.addf %2, %4 : vector<16x128xf32>
    %6 = tpu.iota {dimensions = array<i32: 1>} : vector<16x128xi32>
    %c64_i32 = arith.constant 64 : i32
    %7 = vector.broadcast %c64_i32 : i32 to vector<16x128xi32>
    %8 = arith.cmpi slt, %6, %7 : vector<16x128xi32>
    %cst_5 = arith.constant 0.000000e+00 : f32
    %9 = vector.broadcast %cst_5 : f32 to vector<16x128xf32>
    %10 = arith.select %8, %5, %9 : vector<16x128xi1>, vector<16x128xf32>
    %cst_6 = arith.constant dense<0.000000e+00> : vector<16xf32>
    %11 = vector.multi_reduction <add>, %10, %cst_6 [1] : vector<16x128xf32> to vector<16xf32>
    %12 = vector.shape_cast %11 : vector<16xf32> to vector<16x1xf32>
    %cst_7 = arith.constant 1.562500e-02 : f32
    %13 = vector.broadcast %cst_7 : f32 to vector<16x1xf32>
    %14 = arith.mulf %12, %13 : vector<16x1xf32>
    %15 = vector.broadcast %14 : vector<16x1xf32> to vector<16x128xf32>
    %16 = arith.subf %10, %15 : vector<16x128xf32>
    %cst_8 = arith.constant 0.000000e+00 : f32
    %17 = vector.broadcast %cst_8 : f32 to vector<16x128xf32>
    %18 = arith.select %8, %16, %17 : vector<16x128xi1>, vector<16x128xf32>
    %19 = arith.mulf %18, %18 : vector<16x128xf32>
    %cst_9 = arith.constant dense<0.000000e+00> : vector<16xf32>
    %20 = vector.multi_reduction <add>, %19, %cst_9 [1] : vector<16x128xf32> to vector<16xf32>
    %21 = vector.shape_cast %20 : vector<16xf32> to vector<16x1xf32>
    %cst_10 = arith.constant 1.562500e-02 : f32
    %22 = vector.broadcast %cst_10 : f32 to vector<16x1xf32>
    %23 = arith.mulf %21, %22 : vector<16x1xf32>
    %cst_11 = arith.constant 9.99999974E-6 : f32
    %24 = vector.broadcast %cst_11 : f32 to vector<16x1xf32>
    %25 = arith.addf %23, %24 : vector<16x1xf32>
    %26 = math.rsqrt %25 : vector<16x1xf32>
    %27 = vector.broadcast %26 : vector<16x1xf32> to vector<16x128xf32>
    %28 = arith.mulf %18, %27 : vector<16x128xf32>
    %c0_12 = arith.constant 0 : index
    %c0_13 = arith.constant 0 : index
    %29 = vector.load %arg4[%c0_12, %c0_13] : memref<1x128xf32, #tpu.memory_space<vmem>>, vector<1x128xf32>
    %30 = vector.broadcast %29 : vector<1x128xf32> to vector<16x128xf32>
    %31 = arith.mulf %28, %30 : vector<16x128xf32>
    %c0_14 = arith.constant 0 : index
    %c0_15 = arith.constant 0 : index
    %32 = vector.load %arg5[%c0_14, %c0_15] : memref<1x128xf32, #tpu.memory_space<vmem>>, vector<1x128xf32>
    %33 = vector.broadcast %32 : vector<1x128xf32> to vector<16x128xf32>
    %34 = arith.addf %31, %33 : vector<16x128xf32>
    %cst_16 = arith.constant 0.000000e+00 : f32
    %35 = vector.broadcast %cst_16 : f32 to vector<16x128xf32>
    %36 = arith.maximumf %34, %35 : vector<16x128xf32>
    %c0_17 = arith.constant 0 : index
    %c0_18 = arith.constant 0 : index
    %37 = vector.load %arg6[%c0_17, %c0_18] : memref<16x128xf32, #tpu.memory_space<vmem>>, vector<16x128xf32>
    tpu.vector_store %arg6[%c0_17, %c0_18], %36 {strides = array<i32>} : memref<16x128xf32, #tpu.memory_space<vmem>>, vector<16x128xf32>,
    return
  }
  func.func @transform_0(%arg0: i32) -> (i32, i32) {
    %c0_i32 = arith.constant 0 : i32
    %c0_i32_0 = arith.constant 0 : i32
    return %arg0, %c0_i32 : i32, i32
  }
  func.func @transform_1(%arg0: i32) -> (i32, i32) {
    %c0_i32 = arith.constant 0 : i32
    %c0_i32_0 = arith.constant 0 : i32
    %c0_i32_1 = arith.constant 0 : i32
    return %c0_i32, %c0_i32_0 : i32, i32
  }
  func.func @transform_2(%arg0: i32) -> (i32, i32) {
    %c0_i32 = arith.constant 0 : i32
    %c0_i32_0 = arith.constant 0 : i32
    %c0_i32_1 = arith.constant 0 : i32
    return %c0_i32, %c0_i32_0 : i32, i32
  }
  func.func @transform_3(%arg0: i32) -> (i32, i32) {
    %c0_i32 = arith.constant 0 : i32
    %c0_i32_0 = arith.constant 0 : i32
    %c0_i32_1 = arith.constant 0 : i32
    return %c0_i32, %c0_i32_0 : i32, i32
  }
  func.func @transform_4(%arg0: i32) -> (i32, i32) {
    %c0_i32 = arith.constant 0 : i32
    %c0_i32_0 = arith.constant 0 : i32
    %c0_i32_1 = arith.constant 0 : i32
    return %c0_i32, %c0_i32_0 : i32, i32
  }
  func.func @transform_5(%arg0: i32) -> (i32, i32) {
    %c0_i32 = arith.constant 0 : i32
    %c0_i32_0 = arith.constant 0 : i32
    return %arg0, %c0_i32 : i32, i32
  }
}

</mosaic_0001>

<llo_original>
// kernel: linear_block_forward.1
$region0: #{linear_block_forward.1}
  #allocation0 [shape = 'u32[]', space=smem, size = 0x4, offset = 0x4, fixed_abs, tag = 'smem constant byte address 0x4 - core index']
  #allocation1 [shape = 'u32[144,128]{1,0:T(1,128)}', space=vmem, size = 0x12000, scoped, tag = 'internal scratch']
  %s0 = inlined_call_operand.vmem [shape: bf16[16,32], index: 0, kind: input, shape index: {}]
  %s1 = inlined_call_operand.vmem [shape: bf16[32,128], index: 1, kind: input, shape index: {}]
  %s2 = inlined_call_operand.vmem [shape: f32[1,128], index: 2, kind: input, shape index: {}]
  %s3 = inlined_call_operand.vmem [shape: f32[1,128], index: 3, kind: input, shape index: {}]
  %s4 = inlined_call_operand.vmem [shape: f32[1,128], index: 4, kind: input, shape index: {}]
  %s5 = inlined_call_operand.vmem [shape: f32[16,128], index: 5, kind: output, shape index: {}]
  %s6 = sld [smem:[#allocation0]]
  $region30: #{linear_block_forward.1} parent=0
    _
  %s8 = ssub.s32 1, %s6
  %s9 = scalar_select 0, %s8, %s6
  // Predicated region
  $region2: #{linear_block_forward.1} parent=0 // pred_check
    _
  $region3: #{linear_block_forward.1} parent=0 // pred_check_branch
    %11 = sbr.rel (0) target = $region5
  $region4: #{linear_block_forward.1} parent=0 // pred_region
    _
  $region5: #{linear_block_forward.1} parent=0 // pred_fallthru
    _
  // Predicated region
  $region6: #{linear_block_forward.1} parent=0 // pred_check
    _
  $region7: #{linear_block_forward.1} parent=0 // pred_check_branch
    %13 = sbr.rel (0) target = $region9
  $region8: #{linear_block_forward.1} parent=0 // pred_region
    _
  $region9: #{linear_block_forward.1} parent=0 // pred_fallthru
    _
  // Predicated region
  $region10: #{linear_block_forward.1} parent=0 // pred_check
    _
  $region11: #{linear_block_forward.1} parent=0 // pred_check_branch
    %15 = sbr.rel (0) target = $region13
  $region12: #{linear_block_forward.1} parent=0 // pred_region
    _
  $region13: #{linear_block_forward.1} parent=0 // pred_fallthru
    _
  // Predicated region
  $region14: #{linear_block_forward.1} parent=0 // pred_check
    _
  $region15: #{linear_block_forward.1} parent=0 // pred_check_branch
    %17 = sbr.rel (0) target = $region17
  $region16: #{linear_block_forward.1} parent=0 // pred_region
    _
  $region17: #{linear_block_forward.1} parent=0 // pred_fallthru
    _
  // Predicated region
  $region18: #{linear_block_forward.1} parent=0 // pred_check
    _
  $region19: #{linear_block_forward.1} parent=0 // pred_check_branch
    %19 = sbr.rel (0) target = $region21
  $region20: #{linear_block_forward.1} parent=0 // pred_region
    _
  $region21: #{linear_block_forward.1} parent=0 // pred_fallthru
    _
  %v21 = vld [vmem:[%s0] sm:$0xf]
  %v22 = vld [vmem:[%s0 + $0x4] sm:$0xf]
  %v23 = vld [vmem:[%s1] sm:$0xf]
  %v24 = vld [vmem:[%s1 + $0x4] sm:$0xf]
  %v25 = vld [vmem:[%s1 + $0x8] sm:$0xf]
  %v26 = vld [vmem:[%s1 + $0xc] sm:$0xf]
  %v27 = vld [vmem:[%s2] sm:$0x1]
  %v29 = vlaneseq
  %v30 = vshrl.u32 %v29, 7
  %v31 = vsub.s32 0, %v30
  %v32 = vrot.slane %v27, %v31
  %v36 = vunpack.c.l.b16 %v21
  %v37 = vunpack.c.l.b16 %v22
  %v38 = vpack.c.b16 %v37, %v36
  %v43 = vunpack.c.l.b16 %v23
  %v44 = vunpack.c.l.b16 %v24
  %v45 = vunpack.c.l.b16 %v25
  %v46 = vunpack.c.l.b16 %v26
  %v47 = vpack.c.b16 %v44, %v43
  %v48 = vpack.c.b16 %v46, %v45
  %vm51 = vcmask 261120
  %v53 = vsel %vm51, %v38, 0
  %55 = vmatprep.subr.bf16.mxu0 0
  %56 = vmatpush1.bf16.msra.mxu0 %v47
  %57 = vmatprep.subr.bf16.mxu0 0
  %58 = vmatpush1.bf16.msra.mxu0 %v48
  %59 = vmatprep.subr.bf16.mxu0 0
  %60 = vmatpush1.bf16.msra.mxu0 0
  %61 = vmatprep.subr.bf16.mxu0 0
  %62 = vmatpush1.bf16.msra.mxu0 0
  %63 = vmatprep.subr.bf16.mxu0 0
  %64 = vmatpush1.bf16.msra.mxu0 0
  %65 = vmatprep.subr.bf16.mxu0 0
  %66 = vmatpush1.bf16.msra.mxu0 0
  %67 = vmatprep.subr.bf16.mxu0 0
  %68 = vmatpush1.bf16.msra.mxu0 0
  %69 = vmatprep.subr.bf16.mxu0 0
  %70 = vmatpush1.bf16.msra.mxu0 0
  %71 = vmatprep.subr.bf16.mxu0 0
  %72 = vmatpush1.bf16.msra.mxu0 0
  %73 = vmatprep.subr.bf16.mxu0 0
  %74 = vmatpush1.bf16.msra.mxu0 0
  %75 = vmatprep.subr.bf16.mxu0 0
  %76 = vmatpush1.bf16.msra.mxu0 0
  %77 = vmatprep.subr.bf16.mxu0 0
  %78 = vmatpush1.bf16.msra.mxu0 0
  %79 = vmatprep.subr.bf16.mxu0 0
  %80 = vmatpush1.bf16.msra.mxu0 0
  %81 = vmatprep.subr.bf16.mxu0 0
  %82 = vmatpush1.bf16.msra.mxu0 0
  %83 = vmatprep.subr.bf16.mxu0 0
  %84 = vmatpush1.bf16.msra.mxu0 0
  %85 = vmatprep.subr.bf16.mxu0 0
  %86 = vmatpush1.bf16.msra.mxu0 0
  %87 = vmatprep.mubr.bf16.mxu0 0
  %88 = vmatmul.mubr.bf16.gmra.mrb[0].mxu0 %v53
  %v89 = vpop.f32.mrb[0].mxu0
  %v90 = vadd.f32 %v32, %v89
  %v91 = vpop.f32.mrb[0].mxu0
  %v92 = vpop.f32.mrb[0].mxu0
  %v93 = vadd.f32 %v32, %v92
  %v94 = vpop.f32.mrb[0].mxu0
  %95 = vdwg.mxu0
  %v96 = vlaneseq
  %v97 = vand.u32 %v96, 127
  %vm98 = vcmp.lt.s32.totalorder %v97, 64
  %v99 = vsel %vm98, %v90, 0.0
  %v100 = vsel %vm98, %v93, 0.0
  %101 = vadd.xlane.f32.xlu0 %v99
  %v102 = vpop.xlane.xlu0 %101
  %103 = vadd.xlane.f32.xlu0 %v100
  %v104 = vpop.xlane.xlu0 %103
  %v105 = vmul.f32 %v102, 0.015625
  %v106 = vmul.f32 %v104, 0.015625
  %v107 = vsub.f32 %v99, %v105
  %v108 = vsub.f32 %v100, %v106
  %v109 = vsel %vm98, %v107, 0.0
  %v110 = vsel %vm98, %v108, 0.0
  %v111 = vmul.f32 %v109, %v109
  %v112 = vmul.f32 %v110, %v110
  %113 = vadd.xlane.f32.xlu0 %v111
  %v114 = vpop.xlane.xlu0 %113
  %115 = vadd.xlane.f32.xlu0 %v112
  %v116 = vpop.xlane.xlu0 %115
  %v117 = vmul.f32 %v114, 0.015625
  %v118 = vmul.f32 %v116, 0.015625
  %v119 = vadd.f32 %v117, 1e-05
  %v120 = vadd.f32 %v118, 1e-05
  %v121 = vrsqrt.pop %v119
  %v122 = vrsqrt.pop %v120
  %v123 = vmul.f32 %v109, %v121
  %v124 = vmul.f32 %v110, %v122
  %v125 = vld [vmem:[%s3] sm:$0x1]
  %v127 = vlaneseq
  %v128 = vshrl.u32 %v127, 7
  %v129 = vsub.s32 0, %v128
  %v130 = vrot.slane %v125, %v129
  %v132 = vmul.f32 %v123, %v130
  %v133 = vmul.f32 %v124, %v130
  %v134 = vld [vmem:[%s4] sm:$0x1]
  %v136 = vlaneseq
  %v137 = vshrl.u32 %v136, 7
  %v138 = vsub.s32 0, %v137
  %v139 = vrot.slane %v134, %v138
  %v141 = vadd.f32 %v132, %v139
  %v142 = vadd.f32 %v133, %v139
  %v143 = vmax.f32 %v141, 0.0
  %v144 = vmax.f32 %v142, 0.0
  %145 = vst [vmem:[%s5] sm:$0xff] %v143
  %146 = vst [vmem:[%s5 + $0x8] sm:$0xff] %v144
  // Predicated region
  $region22: #{linear_block_forward.1} parent=0 // pred_check
    _
  $region23: #{linear_block_forward.1} parent=0 // pred_check_branch
    %148 = sbr.rel (0) target = $region25
  $region24: #{linear_block_forward.1} parent=0 // pred_region
    _
  $region25: #{linear_block_forward.1} parent=0 // pred_fallthru
    _
  // Predicated region
  $region26: #{linear_block_forward.1} parent=0 // pred_check
    _
  $region27: #{linear_block_forward.1} parent=0 // pred_check_branch
    %150 = sbr.rel (0) target = $region29
  $region28: #{linear_block_forward.1} parent=0 // pred_region
    _
  $region29: #{linear_block_forward.1} parent=0 // pred_fallthru
    _

</llo_original>
